<compile_context>
chip_gen: v7x
topology: tpu7x:2x2x1
jax: 0.10.0
libtpu: 0.0.40
codegen_flags: <defaults>
</compile_context>

<pallas_src>
import functools
import math

import numpy as np
import jax
import jax.numpy as jnp
from jax.experimental import pallas as pl
from jax.experimental.pallas import tpu as pltpu

# ---------------------------------------------------------------------------
# Module hyperparameters (small, consistent with the PyTorch module)
# ---------------------------------------------------------------------------
HIDDEN_DIM = 32
NUM_HEADS = 4
HEAD_DIM = HIDDEN_DIM // NUM_HEADS
MAX_MODULES = 32
SCALE = math.sqrt(HEAD_DIM)

BATCH = 2
N_MODULES = 8


def create_sparse_mask(n: int, seed: int = 0) -> np.ndarray:
    """Replicates _create_sparse_mask: each module attends to itself + log2(n) random others."""
    rng = np.random.RandomState(seed)
    mask = np.zeros((n, n), dtype=np.float32)
    log_n = max(1, int(math.log2(n)))
    for i in range(n):
        mask[i, i] = 1.0
        idx = rng.permutation(n)[:log_n]
        mask[i, idx] = 1.0
    return mask


# ---------------------------------------------------------------------------
# Pallas kernel: one invocation processes the whole (tiny) batch.
# ---------------------------------------------------------------------------
def attention_kernel(x_ref, wqkv_t_ref, bqkv_ref, wo_t_ref, bo_ref,
                     qmask_ref, bias_ref, out_ref, attn_ref, *, batch, n_modules):
    B, N = batch, n_modules
    H, NH, HD = HIDDEN_DIM, NUM_HEADS, HEAD_DIM
    inv_scale = jnp.float32(1.0 / SCALE)

    x = x_ref[...]                                            # [B*N, H]

    # Fused QKV projection: a single MXU matmul (96-lane output, one vreg wide).
    qkv = jnp.dot(x, wqkv_t_ref[...],
                  preferred_element_type=jnp.float32) + bqkv_ref[...]   # [B*N, 3H]

    # Pure reshapes / static lane slices — no head transposes anywhere.
    q = qkv[:, 0 * H:1 * H].reshape(B, N, H)                  # [B, N, H]
    k = qkv[:, 1 * H:2 * H].reshape(B, N, H)
    v = qkv[:, 2 * H:3 * H].reshape(B, N, H)

    # Head-selection mask: qmask[h*N + q, c] = 1 iff column c belongs to head h.
    qmask4 = qmask_ref[...].reshape(1, NH, N, H)              # [1, NH, N, H]

    # "Block-diagonal" packed Q: rows grouped as (head, query); columns of other
    # heads are zeroed, so a single contraction over the full H gives per-head scores.
    q_bd = (q.reshape(B, 1, N, H) * qmask4).reshape(B, NH * N, H)        # [B, NH*N, H]

    # scores[b, h*N+q, k] = sum_d Q_h[b,q,d] * K_h[b,k,d]  — batched MXU matmul,
    # contraction over the last dims (no k.T materialized).
    scores = jnp.einsum('brd,bkd->brk', q_bd, k,
                        preferred_element_type=jnp.float32)              # [B, NH*N, N]
    # Scale (matches reference ordering) + additive sparse mask (0 / -1e9), one VPU op chain.
    scores = scores * inv_scale + bias_ref[...]

    # Numerically stable softmax over the key axis.
    m = jnp.max(scores, axis=-1, keepdims=True)
    e = jnp.exp(scores - m)
    denom = jnp.sum(e, axis=-1, keepdims=True)
    attn = e * pl.reciprocal(denom, approx=False)             # exact recip (keeps 1e-5 tol)

    # TODO(synk): dropout on attn_weights is identity in eval mode; training-mode
    # dropout is not reproduced here.

    # Natural-layout store; wrapper reshape to [B, NH, N, N] is free.
    attn_ref[...] = attn.astype(attn_ref.dtype)               # [B, NH*N, N]

    # Context: one batched matmul against the full V (all heads' columns), then
    # select own-head columns per row-group with the same mask and a 4-way add.
    # Redundant FLOPs are free here; this removes the head-merge transpose entirely.
    full = jnp.einsum('brk,bkc->brc', attn, v,
                      preferred_element_type=jnp.float32)                # [B, NH*N, H]
    ctx = jnp.sum(full.reshape(B, NH, N, H) * qmask4, axis=1)            # [B, N, H]
    ctx = ctx.reshape(B * N, H)

    # Output projection (W_o pre-transposed once on the host).
    out = jnp.dot(ctx, wo_t_ref[...],
                  preferred_element_type=jnp.float32) + bo_ref[...]      # [B*N, H]
    out_ref[...] = out.astype(out_ref.dtype)


# ---------------------------------------------------------------------------
# One-time host-side parameter transforms (cache the result across calls).
# ---------------------------------------------------------------------------
def prepare_params(w_qkv, b_qkv, w_o, b_o, sparse_mask, n_modules):
    H, NH, HD, N = HIDDEN_DIM, NUM_HEADS, HEAD_DIM, n_modules

    wqkv_t = jnp.asarray(w_qkv, jnp.float32).T                 # [H, 3H]
    bqkv = jnp.asarray(b_qkv, jnp.float32).reshape(1, 3 * H)   # [1, 3H]
    wo_t = jnp.asarray(w_o, jnp.float32).T                     # [H, H]
    bo = jnp.asarray(b_o, jnp.float32).reshape(1, H)           # [1, H]

    # Head-selection mask [NH*N, H].
    head_of_col = np.arange(H) // HD                           # [H]
    head_of_row = np.repeat(np.arange(NH), N)                  # [NH*N]
    qmask = jnp.asarray(
        (head_of_row[:, None] == head_of_col[None, :]).astype(np.float32))

    # Additive sparse-mask bias (0 where attended, -1e9 where masked), tiled over heads.
    mask_np = np.asarray(sparse_mask)[:N, :N]
    bias = np.where(mask_np > 0.5, 0.0, -1.0e9).astype(np.float32)       # [N, N]
    bias_sr = jnp.asarray(np.tile(bias, (NH, 1)))                        # [NH*N, N]

    return dict(wqkv_t=wqkv_t, bqkv=bqkv, wo_t=wo_t, bo=bo,
                qmask=qmask, bias=bias_sr)


# ---------------------------------------------------------------------------
# Jitted forward wrapper.
# ---------------------------------------------------------------------------
@functools.partial(jax.jit, static_argnames=("batch", "n_modules"))
def _forward(x, params, batch, n_modules):
    B, N, H = batch, n_modules, HIDDEN_DIM
    x2d = x.reshape(B * N, H)

    kernel = functools.partial(attention_kernel, batch=B, n_modules=N)

    # Single gridless invocation: everything (a few KB) is VMEM-resident.
    # If many invocations are batched later, add a leading grid axis and mark it
    # "parallel" in pltpu.CompilerParams so v7x's second TensorCore is used.
    out2d, attn_sr = pl.pallas_call(
        kernel,
        out_shape=(
            jax.ShapeDtypeStruct((B * N, H), jnp.float32),               # [16, 32]
            jax.ShapeDtypeStruct((B, NUM_HEADS * N, N), jnp.float32),    # [2, 32, 8]
        ),
        in_specs=[pl.BlockSpec(memory_space=pltpu.MemorySpace.VMEM)] * 7,
        out_specs=(pl.BlockSpec(memory_space=pltpu.MemorySpace.VMEM),
                   pl.BlockSpec(memory_space=pltpu.MemorySpace.VMEM)),
    )(x2d, params["wqkv_t"], params["bqkv"], params["wo_t"], params["bo"],
      params["qmask"], params["bias"])

    out = out2d.reshape(B, N, H)
    attn = attn_sr.reshape(B, NUM_HEADS, N, N)
    return out, attn


def efficient_causal_attention(x, params):
    """x: [B, N, H] float32. Returns (output [B, N, H], attn_weights [B, nh, N, N])."""
    B, N, H = x.shape
    assert H == HIDDEN_DIM and N <= MAX_MODULES
    return _forward(x, params, batch=B, n_modules=N)


# ---------------------------------------------------------------------------
# Plain-JAX reference (mirrors the PyTorch forward, eval mode)
# ---------------------------------------------------------------------------
def reference(x, w_qkv, b_qkv, w_o, b_o, sparse_mask):
    B, N, H = x.shape
    qkv = x @ w_qkv.T + b_qkv                                   # [B, N, 3H]
    qkv = qkv.reshape(B, N, 3, NUM_HEADS, HEAD_DIM).transpose(2, 0, 3, 1, 4)
    q, k, v = qkv[0], qkv[1], qkv[2]                            # [B, nh, N, hd]
    scores = jnp.einsum("bhnd,bhmd->bhnm", q, k) / SCALE
    mask = sparse_mask[:N, :N].astype(bool)[None, None]
    scores = jnp.where(mask, scores, -1.0e9)
    attn = jax.nn.softmax(scores, axis=-1)
    ctx = jnp.einsum("bhnm,bhmd->bhnd", attn, v)
    ctx = ctx.transpose(0, 2, 1, 3).reshape(B, N, H)
    out = ctx @ w_o.T + b_o
    return out, attn


if __name__ == "__main__":
    key = jax.random.PRNGKey(0)
    kx, k1, k2, k3, k4 = jax.random.split(key, 5)

    x = jax.random.normal(kx, (BATCH, N_MODULES, HIDDEN_DIM), dtype=jnp.float32)

    # Deterministic parameter init (shapes follow nn.Linear: [out, in] weights).
    lim = 1.0 / math.sqrt(HIDDEN_DIM)
    w_qkv = jax.random.uniform(k1, (3 * HIDDEN_DIM, HIDDEN_DIM),
                               minval=-lim, maxval=lim, dtype=jnp.float32)
    b_qkv = jax.random.uniform(k2, (3 * HIDDEN_DIM,),
                               minval=-lim, maxval=lim, dtype=jnp.float32)
    w_o = jax.random.uniform(k3, (HIDDEN_DIM, HIDDEN_DIM),
                             minval=-lim, maxval=lim, dtype=jnp.float32)
    b_o = jax.random.uniform(k4, (HIDDEN_DIM,),
                             minval=-lim, maxval=lim, dtype=jnp.float32)

    sparse_mask = jnp.asarray(create_sparse_mask(MAX_MODULES, seed=0))

    # One-time parameter transforms, reused across all calls.
    params = prepare_params(w_qkv, b_qkv, w_o, b_o, sparse_mask, N_MODULES)

    out, attn = efficient_causal_attention(x, params)
    out = jax.block_until_ready(out)
    attn = jax.block_until_ready(attn)

    ref_out, ref_attn = reference(x, w_qkv, b_qkv, w_o, b_o, sparse_mask)
    np.testing.assert_allclose(np.asarray(out), np.asarray(ref_out), rtol=1e-5, atol=1e-5)
    np.testing.assert_allclose(np.asarray(attn), np.asarray(ref_attn), rtol=1e-5, atol=1e-5)

    print("KERNEL_OK")
</pallas_src>

<mosaic_0001>
module attributes {stable_mosaic.version = 11 : i64} {
  func.func @attention_kernel(%arg0: memref<16x32xf32, #tpu.memory_space<vmem>>, %arg1: memref<32x96xf32, #tpu.memory_space<vmem>>, %arg2: memref<1x96xf32, #tpu.memory_space<vmem>>, %arg3: memref<32x32xf32, #tpu.memory_space<vmem>>, %arg4: memref<1x32xf32, #tpu.memory_space<vmem>>, %arg5: memref<32x32xf32, #tpu.memory_space<vmem>>, %arg6: memref<32x8xf32, #tpu.memory_space<vmem>>, %arg7: memref<16x32xf32, #tpu.memory_space<vmem>>, %arg8: memref<2x32x8xf32, #tpu.memory_space<vmem>>) attributes {dimension_semantics = [], scalar_prefetch = 0 : i64, scratch_operands = 0 : i64, tpu.core_type = #tpu.core_type<tc>} {
    %c0 = arith.constant 0 : index
    %c0_0 = arith.constant 0 : index
    %0 = vector.load %arg0[%c0, %c0_0] : memref<16x32xf32, #tpu.memory_space<vmem>>, vector<16x32xf32>
    %c0_1 = arith.constant 0 : index
    %c0_2 = arith.constant 0 : index
    %1 = vector.load %arg1[%c0_1, %c0_2] : memref<32x96xf32, #tpu.memory_space<vmem>>, vector<32x96xf32>
    %cst = arith.constant dense<0.000000e+00> : vector<16x96xf32>
    %2 = tpu.matmul %0, %1, %cst {dimension_numbers = #tpu.dot_dimension_numbers<[1], [0], [0], [1], [0, 0, 1, 1], [], []>} : vector<16x32xf32>, vector<32x96xf32>, vector<16x96xf32> -> vector<16x96xf32>
    %c0_3 = arith.constant 0 : index
    %c0_4 = arith.constant 0 : index
    %3 = vector.load %arg2[%c0_3, %c0_4] : memref<1x96xf32, #tpu.memory_space<vmem>>, vector<1x96xf32>
    %4 = vector.broadcast %3 : vector<1x96xf32> to vector<16x96xf32>
    %5 = arith.addf %2, %4 : vector<16x96xf32>
    %6 = vector.extract_strided_slice %5 {offsets = [0, 0], sizes = [16, 32], strides = [1, 1]} : vector<16x96xf32> to vector<16x32xf32>
    %7 = vector.shape_cast %6 : vector<16x32xf32> to vector<2x8x32xf32>
    %8 = vector.extract_strided_slice %5 {offsets = [0, 32], sizes = [16, 32], strides = [1, 1]} : vector<16x96xf32> to vector<16x32xf32>
    %9 = vector.shape_cast %8 : vector<16x32xf32> to vector<2x8x32xf32>
    %10 = vector.extract_strided_slice %5 {offsets = [0, 64], sizes = [16, 32], strides = [1, 1]} : vector<16x96xf32> to vector<16x32xf32>
    %11 = vector.shape_cast %10 : vector<16x32xf32> to vector<2x8x32xf32>
    %c0_5 = arith.constant 0 : index
    %c0_6 = arith.constant 0 : index
    %12 = vector.load %arg5[%c0_5, %c0_6] : memref<32x32xf32, #tpu.memory_space<vmem>>, vector<32x32xf32>
    %13 = vector.shape_cast %12 : vector<32x32xf32> to vector<1x4x8x32xf32>
    %14 = vector.shape_cast %7 : vector<2x8x32xf32> to vector<2x1x8x32xf32>
    %15 = vector.broadcast %14 : vector<2x1x8x32xf32> to vector<2x4x8x32xf32>
    %16 = vector.broadcast %13 : vector<1x4x8x32xf32> to vector<2x4x8x32xf32>
    %17 = arith.mulf %15, %16 : vector<2x4x8x32xf32>
    %18 = vector.shape_cast %17 : vector<2x4x8x32xf32> to vector<2x32x32xf32>
    "tpu.trace_start"() <{level = 10 : i32, message = "brd,bkd->brk"}> : () -> ()
    %cst_7 = arith.constant dense<0.000000e+00> : vector<2x32x8xf32>
    %19 = tpu.matmul %18, %9, %cst_7 {dimension_numbers = #tpu.dot_dimension_numbers<[2], [2], [1], [1], [0, 0, 0, 1, 1, 1], [0], [0]>} : vector<2x32x32xf32>, vector<2x8x32xf32>, vector<2x32x8xf32> -> vector<2x32x8xf32>
    "tpu.trace_stop"() : () -> ()
    %cst_8 = arith.constant 0.353553385 : f32
    %20 = vector.broadcast %cst_8 : f32 to vector<2x32x8xf32>
    %21 = arith.mulf %19, %20 : vector<2x32x8xf32>
    %c0_9 = arith.constant 0 : index
    %c0_10 = arith.constant 0 : index
    %22 = vector.load %arg6[%c0_9, %c0_10] : memref<32x8xf32, #tpu.memory_space<vmem>>, vector<32x8xf32>
    %23 = vector.shape_cast %22 : vector<32x8xf32> to vector<1x32x8xf32>
    %24 = vector.broadcast %23 : vector<1x32x8xf32> to vector<2x32x8xf32>
    %25 = arith.addf %21, %24 : vector<2x32x8xf32>
    %cst_11 = arith.constant dense<0xFF800000> : vector<2x32xf32>
    %26 = vector.multi_reduction <maximumf>, %25, %cst_11 [2] : vector<2x32x8xf32> to vector<2x32xf32>
    %27 = vector.shape_cast %26 : vector<2x32xf32> to vector<2x32x1xf32>
    %28 = vector.broadcast %27 : vector<2x32x1xf32> to vector<2x32x8xf32>
    %29 = arith.subf %25, %28 : vector<2x32x8xf32>
    %30 = math.exp %29 : vector<2x32x8xf32>
    %cst_12 = arith.constant dense<0.000000e+00> : vector<2x32xf32>
    %31 = vector.multi_reduction <add>, %30, %cst_12 [2] : vector<2x32x8xf32> to vector<2x32xf32>
    %32 = vector.shape_cast %31 : vector<2x32xf32> to vector<2x32x1xf32>
    %33 = tpu.reciprocal %32 : vector<2x32x1xf32> -> vector<2x32x1xf32>
    %34 = vector.broadcast %33 : vector<2x32x1xf32> to vector<2x32x8xf32>
    %35 = arith.mulf %30, %34 : vector<2x32x8xf32>
    %c0_13 = arith.constant 0 : index
    %c0_14 = arith.constant 0 : index
    %c0_15 = arith.constant 0 : index
    %36 = vector.load %arg8[%c0_13, %c0_14, %c0_15] : memref<2x32x8xf32, #tpu.memory_space<vmem>>, vector<2x32x8xf32>
    tpu.vector_store %arg8[%c0_13, %c0_14, %c0_15], %35 {strides = array<i32>} : memref<2x32x8xf32, #tpu.memory_space<vmem>>, vector<2x32x8xf32>,
    "tpu.trace_start"() <{level = 10 : i32, message = "brk,bkc->brc"}> : () -> ()
    %cst_16 = arith.constant dense<0.000000e+00> : vector<2x32x32xf32>
    %37 = tpu.matmul %35, %11, %cst_16 {dimension_numbers = #tpu.dot_dimension_numbers<[2], [1], [1], [2], [0, 0, 0, 1, 1, 2], [0], [0]>} : vector<2x32x8xf32>, vector<2x8x32xf32>, vector<2x32x32xf32> -> vector<2x32x32xf32>
    "tpu.trace_stop"() : () -> ()
    %38 = vector.shape_cast %37 : vector<2x32x32xf32> to vector<2x4x8x32xf32>
    %39 = vector.broadcast %13 : vector<1x4x8x32xf32> to vector<2x4x8x32xf32>
    %40 = arith.mulf %38, %39 : vector<2x4x8x32xf32>
    %cst_17 = arith.constant dense<0.000000e+00> : vector<2x8x32xf32>
    %41 = vector.multi_reduction <add>, %40, %cst_17 [1] : vector<2x4x8x32xf32> to vector<2x8x32xf32>
    %42 = vector.shape_cast %41 : vector<2x8x32xf32> to vector<16x32xf32>
    %c0_18 = arith.constant 0 : index
    %c0_19 = arith.constant 0 : index
    %43 = vector.load %arg3[%c0_18, %c0_19] : memref<32x32xf32, #tpu.memory_space<vmem>>, vector<32x32xf32>
    %cst_20 = arith.constant dense<0.000000e+00> : vector<16x32xf32>
    %44 = tpu.matmul %42, %43, %cst_20 {dimension_numbers = #tpu.dot_dimension_numbers<[1], [0], [0], [1], [0, 0, 1, 1], [], []>} : vector<16x32xf32>, vector<32x32xf32>, vector<16x32xf32> -> vector<16x32xf32>
    %c0_21 = arith.constant 0 : index
    %c0_22 = arith.constant 0 : index
    %45 = vector.load %arg4[%c0_21, %c0_22] : memref<1x32xf32, #tpu.memory_space<vmem>>, vector<1x32xf32>
    %46 = vector.broadcast %45 : vector<1x32xf32> to vector<16x32xf32>
    %47 = arith.addf %44, %46 : vector<16x32xf32>
    %c0_23 = arith.constant 0 : index
    %c0_24 = arith.constant 0 : index
    %48 = vector.load %arg7[%c0_23, %c0_24] : memref<16x32xf32, #tpu.memory_space<vmem>>, vector<16x32xf32>
    tpu.vector_store %arg7[%c0_23, %c0_24], %47 {strides = array<i32>} : memref<16x32xf32, #tpu.memory_space<vmem>>, vector<16x32xf32>,
    return
  }
}

</mosaic_0001>

<llo_original>
// kernel: _forward.1
$region0: #{_forward.1}
  #allocation0 [shape = 'u32[]', space=smem, size = 0x4, offset = 0x4, fixed_abs, tag = 'smem constant byte address 0x4 - core index']
  #allocation1 [shape = 'u32[144,128]{1,0:T(1,128)}', space=vmem, size = 0x12000, scoped, tag = 'internal scratch']
  %s0 = inlined_call_operand.vmem [shape: f32[16,32], index: 0, kind: input, shape index: {}]
  %s1 = inlined_call_operand.vmem [shape: f32[32,96], index: 1, kind: input, shape index: {}]
  %s2 = inlined_call_operand.vmem [shape: f32[1,96], index: 2, kind: input, shape index: {}]
  %s3 = inlined_call_operand.hbm [shape: f32[32,32], index: 3, kind: input, shape index: {}]
  %s4 = inlined_call_operand.vmem [shape: f32[1,32], index: 4, kind: input, shape index: {}]
  %s5 = inlined_call_operand.hbm [shape: f32[32,32], index: 5, kind: input, shape index: {}]
  %s6 = inlined_call_operand.vmem [shape: f32[32,8], index: 6, kind: input, shape index: {}]
  %s7 = inlined_call_operand.hbm [shape: f32[16,32], index: 7, kind: output, shape index: {0}]
  %s8 = inlined_call_operand.hbm [shape: f32[2,32,8], index: 8, kind: output, shape index: {1}]
  %9 = xla_tuple %s7, %s8
  %s10 = sld [smem:[#allocation0]]
  $region54: #{_forward.1} parent=0
    _
  %s12 = ssub.s32 1, %s10
  %s13 = scalar_select 0, %s12, %s10
  $region1: #{_forward.1} parent=0
    #allocation2 [shape = 'u8[16384]{0}', space=vmem, size = 0x4000, scoped, tag = 'input window, operand 3, single buffered']
    #allocation3 [shape = 's32[1]{0}', space=sflag, size = 0x4, scoped, tag = 'scoped memory for _forward.1']
    #allocation4 [shape = 's32[1]{0}', space=sflag, size = 0x4, scoped, tag = 'scoped memory for _forward.1']
    #allocation5 [shape = 'u8[16384]{0}', space=vmem, size = 0x4000, scoped, tag = 'input window, operand 5, single buffered']
    #allocation6 [shape = 's32[1]{0}', space=sflag, size = 0x4, scoped, tag = 'scoped memory for _forward.1']
    #allocation7 [shape = 'u8[8192]{0}', space=vmem, size = 0x2000, scoped, tag = 'output window, operand 0, single buffered']
    #allocation8 [shape = 'u8[32768]{0}', space=vmem, size = 0x8000, scoped, tag = 'output window, operand 1, single buffered']
    #allocation9 [shape = 's32[1]{0}', space=sflag, size = 0x4, scoped, tag = 'scoped memory for _forward.1']
    %14 = vsyncpa [#allocation3], 0
    %15 = vsyncpa [#allocation6], 0
    %16 = vsyncpa [#allocation4], 0
    %17 = vsyncpa [#allocation9], 0
    // Predicated region
    $region2: #{_forward.1} parent=1 // pred_check
      _
    $region3: #{_forward.1} parent=1 // pred_check_branch
      %19 = sbr.rel (0) target = $region5
    $region4: #{_forward.1} parent=1 // pred_region
      _
    $region5: #{_forward.1} parent=1 // pred_fallthru
      _
    // Predicated region
    $region6: #{_forward.1} parent=1 // pred_check
      _
    $region7: #{_forward.1} parent=1 // pred_check_branch
      %21 = sbr.rel (0) target = $region9
    $region8: #{_forward.1} parent=1 // pred_region
      _
    $region9: #{_forward.1} parent=1 // pred_fallthru
      _
    // Predicated region
    $region10: #{_forward.1} parent=1 // pred_check
      _
    $region11: #{_forward.1} parent=1 // pred_check_branch
      %23 = sbr.rel (0) target = $region13
    $region12: #{_forward.1} parent=1 // pred_region
      _
    $region13: #{_forward.1} parent=1 // pred_fallthru
      _
    // Predicated region
    $region14: #{_forward.1} parent=1 // pred_check
      _
    $region15: #{_forward.1} parent=1 // pred_check_branch
      %25 = sbr.rel (0) target = $region17
    $region16: #{_forward.1} parent=1 // pred_region
      %s27 = ssub.s32 512, 512
      %28 = vsyncadd [#allocation3], %s27
      %s29 = sshll.u32 [#allocation2], 4
      %s30 = int_to_ptr.vmem [resolvable:$true] %s29
      %35 = dma.hbm_to_vmem [thread:$0]  %s3, 512, %s30, [#allocation3], 128, 128, 8
    $region17: #{_forward.1} parent=1 // pred_fallthru
      _
    // Predicated region
    $region18: #{_forward.1} parent=1 // pred_check
      _
    $region19: #{_forward.1} parent=1 // pred_check_branch
      %37 = sbr.rel (0) target = $region21
    $region20: #{_forward.1} parent=1 // pred_region
      _
    $region21: #{_forward.1} parent=1 // pred_fallthru
      _
    // Predicated region
    $region22: #{_forward.1} parent=1 // pred_check
      _
    $region23: #{_forward.1} parent=1 // pred_check_branch
      %39 = sbr.rel (0) target = $region25
    $region24: #{_forward.1} parent=1 // pred_region
      %s41 = ssub.s32 512, 512
      %42 = vsyncadd [#allocation6], %s41
      %s43 = sshll.u32 [#allocation5], 4
      %s44 = int_to_ptr.vmem [resolvable:$true] %s43
      %49 = dma.hbm_to_vmem [thread:$0]  %s5, 512, %s44, [#allocation6], 128, 128, 8
    $region25: #{_forward.1} parent=1 // pred_fallthru
      _
    // Predicated region
    $region26: #{_forward.1} parent=1 // pred_check
      _
    $region27: #{_forward.1} parent=1 // pred_check_branch
      %51 = sbr.rel (0) target = $region29
    $region28: #{_forward.1} parent=1 // pred_region
      _
    $region29: #{_forward.1} parent=1 // pred_fallthru
      _
    // Predicated region
    $region30: #{_forward.1} parent=1 // pred_check
      _
    $region31: #{_forward.1} parent=1 // pred_check_branch
      %53 = sbr.rel (0) target = $region33
    $region32: #{_forward.1} parent=1 // pred_region
      %54 = dma.done [#allocation3], 512
    $region33: #{_forward.1} parent=1 // pred_fallthru
      _
    // Predicated region
    $region34: #{_forward.1} parent=1 // pred_check
      _
    $region35: #{_forward.1} parent=1 // pred_check_branch
      %56 = sbr.rel (0) target = $region37
    $region36: #{_forward.1} parent=1 // pred_region
      %57 = dma.done [#allocation6], 512
    $region37: #{_forward.1} parent=1 // pred_fallthru
      _
    %v58 = vld [vmem:[%s0] sm:$0xff]
    %v59 = vld [vmem:[%s0 + $0x8] sm:$0xff]
    %v60 = vld [vmem:[%s1] sm:$0xff]
    %v61 = vld [vmem:[%s1 + $0x8] sm:$0xff]
    %v62 = vld [vmem:[%s1 + $0x10] sm:$0xff]
    %v63 = vld [vmem:[%s1 + $0x18] sm:$0xff]
    %v64 = vld [vmem:[%s2] sm:$0x1]
    %v66 = vlaneseq
    %v67 = vshrl.u32 %v66, 7
    %v68 = vsub.s32 0, %v67
    %v69 = vrot.slane %v64, %v68
    %vm71 = vcmask 261120
    %v73 = vsel %vm71, %v58, 0
    %v76 = vsel %vm71, %v59, 0
    %78 = vmatprep.subr.mxu0 0.0
    %79 = vmatpush1.msra.mxu0 %v60
    %80 = vmatprep.subr.mxu0 0.0
    %81 = vmatpush1.msra.mxu0 %v61
    %82 = vmatprep.subr.mxu0 0.0
    %83 = vmatpush1.msra.mxu0 %v62
    %84 = vmatprep.subr.mxu0 0.0
    %85 = vmatpush1.msra.mxu0 %v63
    %86 = vmatprep.subr.mxu0 0.0
    %87 = vmatpush1.msra.mxu0 0.0
    %88 = vmatprep.subr.mxu0 0.0
    %89 = vmatpush1.msra.mxu0 0.0
    %90 = vmatprep.subr.mxu0 0.0
    %91 = vmatpush1.msra.mxu0 0.0
    %92 = vmatprep.subr.mxu0 0.0
    %93 = vmatpush1.msra.mxu0 0.0
    %94 = vmatprep.subr.mxu0 0.0
    %95 = vmatpush1.msra.mxu0 0.0
    %96 = vmatprep.subr.mxu0 0.0
    %97 = vmatpush1.msra.mxu0 0.0
    %98 = vmatprep.subr.mxu0 0.0
    %99 = vmatpush1.msra.mxu0 0.0
    %100 = vmatprep.subr.mxu0 0.0
    %101 = vmatpush1.msra.mxu0 0.0
    %102 = vmatprep.subr.mxu0 0.0
    %103 = vmatpush1.msra.mxu0 0.0
    %104 = vmatprep.subr.mxu0 0.0
    %105 = vmatpush1.msra.mxu0 0.0
    %106 = vmatprep.subr.mxu0 0.0
    %107 = vmatpush1.msra.mxu0 0.0
    %108 = vmatprep.subr.mxu0 0.0
    %109 = vmatpush1.msra.mxu0 0.0
    %110 = vmatprep.subr.mxu0 0.0
    %111 = vmatpush1.msra.mxu0 0.0
    %112 = vmatprep.subr.mxu0 0.0
    %113 = vmatpush1.msra.mxu0 0.0
    %114 = vmatprep.subr.mxu0 0.0
    %115 = vmatpush1.msra.mxu0 0.0
    %116 = vmatprep.subr.mxu0 0.0
    %117 = vmatpush1.msra.mxu0 0.0
    %118 = vmatprep.subr.mxu0 0.0
    %119 = vmatpush1.msra.mxu0 0.0
    %120 = vmatprep.subr.mxu0 0.0
    %121 = vmatpush1.msra.mxu0 0.0
    %122 = vmatprep.subr.mxu0 0.0
    %123 = vmatpush1.msra.mxu0 0.0
    %124 = vmatprep.subr.mxu0 0.0
    %125 = vmatpush1.msra.mxu0 0.0
    %126 = vmatprep.subr.mxu0 0.0
    %127 = vmatpush1.msra.mxu0 0.0
    %128 = vmatprep.subr.mxu0 0.0
    %129 = vmatpush1.msra.mxu0 0.0
    %130 = vmatprep.subr.mxu0 0.0
    %131 = vmatpush1.msra.mxu0 0.0
    %132 = vmatprep.subr.mxu0 0.0
    %133 = vmatpush1.msra.mxu0 0.0
    %134 = vmatprep.subr.mxu0 0.0
    %135 = vmatpush1.msra.mxu0 0.0
    %136 = vmatprep.subr.mxu0 0.0
    %137 = vmatpush1.msra.mxu0 0.0
    %138 = vmatprep.subr.mxu0 0.0
    %139 = vmatpush1.msra.mxu0 0.0
    %140 = vmatprep.subr.mxu0 0.0
    %141 = vmatpush1.msra.mxu0 0.0
    %142 = vmatprep.mubr.f32.mxu0 0.0
    %143 = vmatmul.mubr.f32.gmra.mrb[0].mxu0 %v73
    %v144 = vpop.f32.mrb[0].mxu0
    %v145 = vadd.f32 %v69, %v144
    %v146 = vpop.f32.mrb[0].mxu0
    %147 = vmatprep.mubr.f32.mxu0 0.0
    %148 = vmatmul.mubr.f32.gmra.mrb[0].mxu0 %v76
    %v149 = vpop.f32.mrb[0].mxu0
    %v150 = vadd.f32 %v69, %v149
    %v151 = vpop.f32.mrb[0].mxu0
    %152 = vdwg.mxu0
    %v153 = vld [vmem:[#allocation5] sm:$0xff]
    %v154 = vld [vmem:[#allocation5 + $0x8] sm:$0xff]
    %v155 = vld [vmem:[#allocation5 + $0x10] sm:$0xff]
    %v156 = vld [vmem:[#allocation5 + $0x18] sm:$0xff]
    %v157 = vmul.f32 %v145, %v153
    %v158 = vmul.f32 %v145, %v154
    %v159 = vmul.f32 %v145, %v155
    %v160 = vmul.f32 %v145, %v156
    %v161 = vmul.f32 %v150, %v153
    %v162 = vmul.f32 %v150, %v154
    %v163 = vmul.f32 %v150, %v155
    %v164 = vmul.f32 %v150, %v156
    %166 = vrot.lane.b32.xlu0 %v145, 96
    %v167 = vpop.permute.xlu0 %166
    %v169 = vsel %vm71, %v157, 0
    %v172 = vsel %vm71, %v158, 0
    %v175 = vsel %vm71, %v159, 0
    %v178 = vsel %vm71, %v160, 0
    %v180 = vsel %vm71, %v167, 0
    %182 = vmatprep.subr.mxu0 0.0
    %183 = vmatpush1.xpose.msra.mxu0 %v180
    %184 = vmatprep.subr.mxu0 0.0
    %185 = vmatpush1.xpose.msra.mxu0 0.0
    %186 = vmatprep.subr.mxu0 0.0
    %187 = vmatpush1.xpose.msra.mxu0 0.0
    %188 = vmatprep.subr.mxu0 0.0
    %189 = vmatpush1.xpose.msra.mxu0 0.0
    %190 = vmatprep.subr.mxu0 0.0
    %191 = vmatpush1.xpose.msra.mxu0 0.0
    %192 = vmatprep.subr.mxu0 0.0
    %193 = vmatpush1.xpose.msra.mxu0 0.0
    %194 = vmatprep.subr.mxu0 0.0
    %195 = vmatpush1.xpose.msra.mxu0 0.0
    %196 = vmatprep.subr.mxu0 0.0
    %197 = vmatpush1.xpose.msra.mxu0 0.0
    %198 = vmatprep.subr.mxu0 0.0
    %199 = vmatpush1.xpose.msra.mxu0 0.0
    %200 = vmatprep.subr.mxu0 0.0
    %201 = vmatpush1.xpose.msra.mxu0 0.0
    %202 = vmatprep.subr.mxu0 0.0
    %203 = vmatpush1.xpose.msra.mxu0 0.0
    %204 = vmatprep.subr.mxu0 0.0
    %205 = vmatpush1.xpose.msra.mxu0 0.0
    %206 = vmatprep.subr.mxu0 0.0
    %207 = vmatpush1.xpose.msra.mxu0 0.0
    %208 = vmatprep.subr.mxu0 0.0
    %209 = vmatpush1.xpose.msra.mxu0 0.0
    %210 = vmatprep.subr.mxu0 0.0
    %211 = vmatpush1.xpose.msra.mxu0 0.0
    %212 = vmatprep.subr.mxu0 0.0
    %213 = vmatpush1.xpose.msra.mxu0 0.0
    %214 = vmatprep.subr.mxu0 0.0
    %215 = vmatpush1.xpose.msra.mxu0 0.0
    %216 = vmatprep.subr.mxu0 0.0
    %217 = vmatpush1.xpose.msra.mxu0 0.0
    %218 = vmatprep.subr.mxu0 0.0
    %219 = vmatpush1.xpose.msra.mxu0 0.0
    %220 = vmatprep.subr.mxu0 0.0
    %221 = vmatpush1.xpose.msra.mxu0 0.0
    %222 = vmatprep.subr.mxu0 0.0
    %223 = vmatpush1.xpose.msra.mxu0 0.0
    %224 = vmatprep.subr.mxu0 0.0
    %225 = vmatpush1.xpose.msra.mxu0 0.0
    %226 = vmatprep.subr.mxu0 0.0
    %227 = vmatpush1.xpose.msra.mxu0 0.0
    %228 = vmatprep.subr.mxu0 0.0
    %229 = vmatpush1.xpose.msra.mxu0 0.0
    %230 = vmatprep.subr.mxu0 0.0
    %231 = vmatpush1.xpose.msra.mxu0 0.0
    %232 = vmatprep.subr.mxu0 0.0
    %233 = vmatpush1.xpose.msra.mxu0 0.0
    %234 = vmatprep.subr.mxu0 0.0
    %235 = vmatpush1.xpose.msra.mxu0 0.0
    %236 = vmatprep.subr.mxu0 0.0
    %237 = vmatpush1.xpose.msra.mxu0 0.0
    %238 = vmatprep.subr.mxu0 0.0
    %239 = vmatpush1.xpose.msra.mxu0 0.0
    %240 = vmatprep.subr.mxu0 0.0
    %241 = vmatpush1.xpose.msra.mxu0 0.0
    %242 = vmatprep.subr.mxu0 0.0
    %243 = vmatpush1.xpose.msra.mxu0 0.0
    %244 = vmatprep.subr.mxu0 0.0
    %245 = vmatpush1.xpose.msra.mxu0 0.0
    %246 = vmatprep.mubr.f32.mxu0 0.0
    %247 = vmatmul.mubr.f32.gmra.mrb[0].mxu0 %v169
    %v248 = vpop.f32.mrb[0].mxu0
    %v249 = vadd.f32 0.0, %v248
    %v250 = vpop.f32.mrb[0].mxu0
    %251 = vmatprep.mubr.f32.mxu0 0.0
    %252 = vmatmul.mubr.f32.gmra.mrb[0].mxu0 %v172
    %v253 = vpop.f32.mrb[0].mxu0
    %v254 = vadd.f32 0.0, %v253
    %v255 = vpop.f32.mrb[0].mxu0
    %256 = vmatprep.mubr.f32.mxu0 0.0
    %257 = vmatmul.mubr.f32.gmra.mrb[0].mxu0 %v175
    %v258 = vpop.f32.mrb[0].mxu0
    %v259 = vadd.f32 0.0, %v258
    %v260 = vpop.f32.mrb[0].mxu0
    %261 = vmatprep.mubr.f32.mxu0 0.0
    %262 = vmatmul.mubr.f32.gmra.mrb[0].mxu0 %v178
    %v263 = vpop.f32.mrb[0].mxu0
    %v264 = vadd.f32 0.0, %v263
    %v265 = vpop.f32.mrb[0].mxu0
    %266 = vdwg.mxu0
    %268 = vrot.lane.b32.xlu0 %v150, 96
    %v269 = vpop.permute.xlu0 %268
    %v271 = vsel %vm71, %v161, 0
    %v274 = vsel %vm71, %v162, 0
    %v277 = vsel %vm71, %v163, 0
    %v280 = vsel %vm71, %v164, 0
    %v282 = vsel %vm71, %v269, 0
    %284 = vmatprep.subr.mxu0 0.0
    %285 = vmatpush1.xpose.msra.mxu0 %v282
    %286 = vmatprep.subr.mxu0 0.0
    %287 = vmatpush1.xpose.msra.mxu0 0.0
    %288 = vmatprep.subr.mxu0 0.0
    %289 = vmatpush1.xpose.msra.mxu0 0.0
    %290 = vmatprep.subr.mxu0 0.0
    %291 = vmatpush1.xpose.msra.mxu0 0.0
    %292 = vmatprep.subr.mxu0 0.0
    %293 = vmatpush1.xpose.msra.mxu0 0.0
    %294 = vmatprep.subr.mxu0 0.0
    %295 = vmatpush1.xpose.msra.mxu0 0.0
    %296 = vmatprep.subr.mxu0 0.0
    %297 = vmatpush1.xpose.msra.mxu0 0.0
    %298 = vmatprep.subr.mxu0 0.0
    %299 = vmatpush1.xpose.msra.mxu0 0.0
    %300 = vmatprep.subr.mxu0 0.0
    %301 = vmatpush1.xpose.msra.mxu0 0.0
    %302 = vmatprep.subr.mxu0 0.0
    %303 = vmatpush1.xpose.msra.mxu0 0.0
    %304 = vmatprep.subr.mxu0 0.0
    %305 = vmatpush1.xpose.msra.mxu0 0.0
    %306 = vmatprep.subr.mxu0 0.0
    %307 = vmatpush1.xpose.msra.mxu0 0.0
    %308 = vmatprep.subr.mxu0 0.0
    %309 = vmatpush1.xpose.msra.mxu0 0.0
    %310 = vmatprep.subr.mxu0 0.0
    %311 = vmatpush1.xpose.msra.mxu0 0.0
    %312 = vmatprep.subr.mxu0 0.0
    %313 = vmatpush1.xpose.msra.mxu0 0.0
    %314 = vmatprep.subr.mxu0 0.0
    %315 = vmatpush1.xpose.msra.mxu0 0.0
    %316 = vmatprep.subr.mxu0 0.0
    %317 = vmatpush1.xpose.msra.mxu0 0.0
    %318 = vmatprep.subr.mxu0 0.0
    %319 = vmatpush1.xpose.msra.mxu0 0.0
    %320 = vmatprep.subr.mxu0 0.0
    %321 = vmatpush1.xpose.msra.mxu0 0.0
    %322 = vmatprep.subr.mxu0 0.0
    %323 = vmatpush1.xpose.msra.mxu0 0.0
    %324 = vmatprep.subr.mxu0 0.0
    %325 = vmatpush1.xpose.msra.mxu0 0.0
    %326 = vmatprep.subr.mxu0 0.0
    %327 = vmatpush1.xpose.msra.mxu0 0.0
    %328 = vmatprep.subr.mxu0 0.0
    %329 = vmatpush1.xpose.msra.mxu0 0.0
    %330 = vmatprep.subr.mxu0 0.0
    %331 = vmatpush1.xpose.msra.mxu0 0.0
    %332 = vmatprep.subr.mxu0 0.0
    %333 = vmatpush1.xpose.msra.mxu0 0.0
    %334 = vmatprep.subr.mxu0 0.0
    %335 = vmatpush1.xpose.msra.mxu0 0.0
    %336 = vmatprep.subr.mxu0 0.0
    %337 = vmatpush1.xpose.msra.mxu0 0.0
    %338 = vmatprep.subr.mxu0 0.0
    %339 = vmatpush1.xpose.msra.mxu0 0.0
    %340 = vmatprep.subr.mxu0 0.0
    %341 = vmatpush1.xpose.msra.mxu0 0.0
    %342 = vmatprep.subr.mxu0 0.0
    %343 = vmatpush1.xpose.msra.mxu0 0.0
    %344 = vmatprep.subr.mxu0 0.0
    %345 = vmatpush1.xpose.msra.mxu0 0.0
    %346 = vmatprep.subr.mxu0 0.0
    %347 = vmatpush1.xpose.msra.mxu0 0.0
    %348 = vmatprep.mubr.f32.mxu0 0.0
    %349 = vmatmul.mubr.f32.gmra.mrb[0].mxu0 %v271
    %v350 = vpop.f32.mrb[0].mxu0
    %v351 = vadd.f32 0.0, %v350
    %v352 = vpop.f32.mrb[0].mxu0
    %353 = vmatprep.mubr.f32.mxu0 0.0
    %354 = vmatmul.mubr.f32.gmra.mrb[0].mxu0 %v274
    %v355 = vpop.f32.mrb[0].mxu0
    %v356 = vadd.f32 0.0, %v355
    %v357 = vpop.f32.mrb[0].mxu0
    %358 = vmatprep.mubr.f32.mxu0 0.0
    %359 = vmatmul.mubr.f32.gmra.mrb[0].mxu0 %v277
    %v360 = vpop.f32.mrb[0].mxu0
    %v361 = vadd.f32 0.0, %v360
    %v362 = vpop.f32.mrb[0].mxu0
    %363 = vmatprep.mubr.f32.mxu0 0.0
    %364 = vmatmul.mubr.f32.gmra.mrb[0].mxu0 %v280
    %v365 = vpop.f32.mrb[0].mxu0
    %v366 = vadd.f32 0.0, %v365
    %v367 = vpop.f32.mrb[0].mxu0
    %368 = vdwg.mxu0
    %v369 = vmul.f32 %v249, 0.35355338
    %v370 = vmul.f32 %v254, 0.35355338
    %v371 = vmul.f32 %v259, 0.35355338
    %v372 = vmul.f32 %v264, 0.35355338
    %v373 = vmul.f32 %v351, 0.35355338
    %v374 = vmul.f32 %v356, 0.35355338
    %v375 = vmul.f32 %v361, 0.35355338
    %v376 = vmul.f32 %v366, 0.35355338
    %v377 = vld [vmem:[%s6] sm:$0xff]
    %v378 = vld [vmem:[%s6 + $0x8] sm:$0xff]
    %v379 = vld [vmem:[%s6 + $0x10] sm:$0xff]
    %v380 = vld [vmem:[%s6 + $0x18] sm:$0xff]
    %v381 = vadd.f32 %v369, %v377
    %v382 = vadd.f32 %v370, %v378
    %v383 = vadd.f32 %v371, %v379
    %v384 = vadd.f32 %v372, %v380
    %v385 = vadd.f32 %v373, %v377
    %v386 = vadd.f32 %v374, %v378
    %v387 = vadd.f32 %v375, %v379
    %v388 = vadd.f32 %v376, %v380
    %vm389 = vcmask 64512
    %v390 = vsel %vm389, %v381, -inf
    %391 = vmax.xlane.f32.xlu0 %v390
    %v392 = vpop.xlane.xlu0 %391
    %v393 = vsel %vm389, %v382, -inf
    %394 = vmax.xlane.f32.xlu0 %v393
    %v395 = vpop.xlane.xlu0 %394
    %v396 = vsel %vm389, %v383, -inf
    %397 = vmax.xlane.f32.xlu0 %v396
    %v398 = vpop.xlane.xlu0 %397
    %v399 = vsel %vm389, %v384, -inf
    %400 = vmax.xlane.f32.xlu0 %v399
    %v401 = vpop.xlane.xlu0 %400
    %v402 = vsel %vm389, %v385, -inf
    %403 = vmax.xlane.f32.xlu0 %v402
    %v404 = vpop.xlane.xlu0 %403
    %v405 = vsel %vm389, %v386, -inf
    %406 = vmax.xlane.f32.xlu0 %v405
    %v407 = vpop.xlane.xlu0 %406
    %v408 = vsel %vm389, %v387, -inf
    %409 = vmax.xlane.f32.xlu0 %v408
    %v410 = vpop.xlane.xlu0 %409
    %v411 = vsel %vm389, %v388, -inf
    %412 = vmax.xlane.f32.xlu0 %v411
    %v413 = vpop.xlane.xlu0 %412
    %v414 = vsub.f32 %v381, %v392
    %v415 = vsub.f32 %v382, %v395
    %v416 = vsub.f32 %v383, %v398
    %v417 = vsub.f32 %v384, %v401
    %v418 = vsub.f32 %v385, %v404
    %v419 = vsub.f32 %v386, %v407
    %v420 = vsub.f32 %v387, %v410
    %v421 = vsub.f32 %v388, %v413
    %v422 = vmul.f32 %v414, 1.442695
    %v423 = vpow.pop %v422
    %v424 = vmul.f32 %v415, 1.442695
    %v425 = vpow.pop %v424
    %v426 = vmul.f32 %v416, 1.442695
    %v427 = vpow.pop %v426
    %v428 = vmul.f32 %v417, 1.442695
    %v429 = vpow.pop %v428
    %v430 = vmul.f32 %v418, 1.442695
    %v431 = vpow.pop %v430
    %v432 = vmul.f32 %v419, 1.442695
    %v433 = vpow.pop %v432
    %v434 = vmul.f32 %v420, 1.442695
    %v435 = vpow.pop %v434
    %v436 = vmul.f32 %v421, 1.442695
    %v437 = vpow.pop %v436
    %v438 = vsel %vm389, %v423, 0.0
    %439 = vadd.xlane.f32.xlu0 %v438
    %v440 = vpop.xlane.xlu0 %439
    %v441 = vsel %vm389, %v425, 0.0
    %442 = vadd.xlane.f32.xlu0 %v441
    %v443 = vpop.xlane.xlu0 %442
    %v444 = vsel %vm389, %v427, 0.0
    %445 = vadd.xlane.f32.xlu0 %v444
    %v446 = vpop.xlane.xlu0 %445
    %v447 = vsel %vm389, %v429, 0.0
    %448 = vadd.xlane.f32.xlu0 %v447
    %v449 = vpop.xlane.xlu0 %448
    %v450 = vsel %vm389, %v431, 0.0
    %451 = vadd.xlane.f32.xlu0 %v450
    %v452 = vpop.xlane.xlu0 %451
    %v453 = vsel %vm389, %v433, 0.0
    %454 = vadd.xlane.f32.xlu0 %v453
    %v455 = vpop.xlane.xlu0 %454
    %v456 = vsel %vm389, %v435, 0.0
    %457 = vadd.xlane.f32.xlu0 %v456
    %v458 = vpop.xlane.xlu0 %457
    %v459 = vsel %vm389, %v437, 0.0
    %460 = vadd.xlane.f32.xlu0 %v459
    %v461 = vpop.xlane.xlu0 %460
    %v462 = vrcp.pop %v440
    %v463 = vrcp.pop %v443
    %v464 = vrcp.pop %v446
    %v465 = vrcp.pop %v449
    %v466 = vrcp.pop %v452
    %v467 = vrcp.pop %v455
    %v468 = vrcp.pop %v458
    %v469 = vrcp.pop %v461
    %v470 = vmul.f32 %v423, %v462
    %v471 = vmul.f32 %v425, %v463
    %v472 = vmul.f32 %v427, %v464
    %v473 = vmul.f32 %v429, %v465
    %v474 = vmul.f32 %v431, %v466
    %v475 = vmul.f32 %v433, %v467
    %v476 = vmul.f32 %v435, %v468
    %v477 = vmul.f32 %v437, %v469
    %478 = vst.msk [vmem:[#allocation8] sm:$0xff] %vm389, %v470
    %479 = vst.msk [vmem:[#allocation8 + $0x8] sm:$0xff] %vm389, %v471
    %480 = vst.msk [vmem:[#allocation8 + $0x10] sm:$0xff] %vm389, %v472
    %481 = vst.msk [vmem:[#allocation8 + $0x18] sm:$0xff] %vm389, %v473
    %482 = vst.msk [vmem:[#allocation8 + $0x20] sm:$0xff] %vm389, %v474
    %483 = vst.msk [vmem:[#allocation8 + $0x28] sm:$0xff] %vm389, %v475
    %484 = vst.msk [vmem:[#allocation8 + $0x30] sm:$0xff] %vm389, %v476
    %485 = vst.msk [vmem:[#allocation8 + $0x38] sm:$0xff] %vm389, %v477
    %486 = vrot.lane.b32.xlu0 %v145, 64
    %v487 = vpop.permute.xlu0 %486
    %v490 = vsel %vm389, %v470, 0
    %v493 = vsel %vm389, %v471, 0
    %v496 = vsel %vm389, %v472, 0
    %v499 = vsel %vm389, %v473, 0
    %501 = vmatprep.subr.mxu0 0.0
    %502 = vmatpush1.msra.mxu0 %v487
    %503 = vmatprep.subr.mxu0 0.0
    %504 = vmatpush1.msra.mxu0 0.0
    %505 = vmatprep.subr.mxu0 0.0
    %506 = vmatpush1.msra.mxu0 0.0
    %507 = vmatprep.subr.mxu0 0.0
    %508 = vmatpush1.msra.mxu0 0.0
    %509 = vmatprep.subr.mxu0 0.0
    %510 = vmatpush1.msra.mxu0 0.0
    %511 = vmatprep.subr.mxu0 0.0
    %512 = vmatpush1.msra.mxu0 0.0
    %513 = vmatprep.subr.mxu0 0.0
    %514 = vmatpush1.msra.mxu0 0.0
    %515 = vmatprep.subr.mxu0 0.0
    %516 = vmatpush1.msra.mxu0 0.0
    %517 = vmatprep.subr.mxu0 0.0
    %518 = vmatpush1.msra.mxu0 0.0
    %519 = vmatprep.subr.mxu0 0.0
    %520 = vmatpush1.msra.mxu0 0.0
    %521 = vmatprep.subr.mxu0 0.0
    %522 = vmatpush1.msra.mxu0 0.0
    %523 = vmatprep.subr.mxu0 0.0
    %524 = vmatpush1.msra.mxu0 0.0
    %525 = vmatprep.subr.mxu0 0.0
    %526 = vmatpush1.msra.mxu0 0.0
    %527 = vmatprep.subr.mxu0 0.0
    %528 = vmatpush1.msra.mxu0 0.0
    %529 = vmatprep.subr.mxu0 0.0
    %530 = vmatpush1.msra.mxu0 0.0
    %531 = vmatprep.subr.mxu0 0.0
    %532 = vmatpush1.msra.mxu0 0.0
    %533 = vmatprep.subr.mxu0 0.0
    %534 = vmatpush1.msra.mxu0 0.0
    %535 = vmatprep.subr.mxu0 0.0
    %536 = vmatpush1.msra.mxu0 0.0
    %537 = vmatprep.subr.mxu0 0.0
    %538 = vmatpush1.msra.mxu0 0.0
    %539 = vmatprep.subr.mxu0 0.0
    %540 = vmatpush1.msra.mxu0 0.0
    %541 = vmatprep.subr.mxu0 0.0
    %542 = vmatpush1.msra.mxu0 0.0
    %543 = vmatprep.subr.mxu0 0.0
    %544 = vmatpush1.msra.mxu0 0.0
    %545 = vmatprep.subr.mxu0 0.0
    %546 = vmatpush1.msra.mxu0 0.0
    %547 = vmatprep.subr.mxu0 0.0
    %548 = vmatpush1.msra.mxu0 0.0
    %549 = vmatprep.subr.mxu0 0.0
    %550 = vmatpush1.msra.mxu0 0.0
    %551 = vmatprep.subr.mxu0 0.0
    %552 = vmatpush1.msra.mxu0 0.0
    %553 = vmatprep.subr.mxu0 0.0
    %554 = vmatpush1.msra.mxu0 0.0
    %555 = vmatprep.subr.mxu0 0.0
    %556 = vmatpush1.msra.mxu0 0.0
    %557 = vmatprep.subr.mxu0 0.0
    %558 = vmatpush1.msra.mxu0 0.0
    %559 = vmatprep.subr.mxu0 0.0
    %560 = vmatpush1.msra.mxu0 0.0
    %561 = vmatprep.subr.mxu0 0.0
    %562 = vmatpush1.msra.mxu0 0.0
    %563 = vmatprep.subr.mxu0 0.0
    %564 = vmatpush1.msra.mxu0 0.0
    %565 = vmatprep.mubr.f32.mxu0 0.0
    %566 = vmatmul.mubr.f32.gmra.mrb[0].mxu0 %v490
    %v567 = vpop.f32.mrb[0].mxu0
    %v568 = vadd.f32 0.0, %v567
    %v569 = vpop.f32.mrb[0].mxu0
    %570 = vmatprep.mubr.f32.mxu0 0.0
    %571 = vmatmul.mubr.f32.gmra.mrb[0].mxu0 %v493
    %v572 = vpop.f32.mrb[0].mxu0
    %v573 = vadd.f32 0.0, %v572
    %v574 = vpop.f32.mrb[0].mxu0
    %575 = vmatprep.mubr.f32.mxu0 0.0
    %576 = vmatmul.mubr.f32.gmra.mrb[0].mxu0 %v496
    %v577 = vpop.f32.mrb[0].mxu0
    %v578 = vadd.f32 0.0, %v577
    %v579 = vpop.f32.mrb[0].mxu0
    %580 = vmatprep.mubr.f32.mxu0 0.0
    %581 = vmatmul.mubr.f32.gmra.mrb[0].mxu0 %v499
    %v582 = vpop.f32.mrb[0].mxu0
    %v583 = vadd.f32 0.0, %v582
    %v584 = vpop.f32.mrb[0].mxu0
    %585 = vdwg.mxu0
    %586 = vrot.lane.b32.xlu0 %v150, 64
    %v587 = vpop.permute.xlu0 %586
    %v590 = vsel %vm389, %v474, 0
    %v593 = vsel %vm389, %v475, 0
    %v596 = vsel %vm389, %v476, 0
    %v599 = vsel %vm389, %v477, 0
    %601 = vmatprep.subr.mxu0 0.0
    %602 = vmatpush1.msra.mxu0 %v587
    %603 = vmatprep.subr.mxu0 0.0
    %604 = vmatpush1.msra.mxu0 0.0
    %605 = vmatprep.subr.mxu0 0.0
    %606 = vmatpush1.msra.mxu0 0.0
    %607 = vmatprep.subr.mxu0 0.0
    %608 = vmatpush1.msra.mxu0 0.0
    %609 = vmatprep.subr.mxu0 0.0
    %610 = vmatpush1.msra.mxu0 0.0
    %611 = vmatprep.subr.mxu0 0.0
    %612 = vmatpush1.msra.mxu0 0.0
    %613 = vmatprep.subr.mxu0 0.0
    %614 = vmatpush1.msra.mxu0 0.0
    %615 = vmatprep.subr.mxu0 0.0
    %616 = vmatpush1.msra.mxu0 0.0
    %617 = vmatprep.subr.mxu0 0.0
    %618 = vmatpush1.msra.mxu0 0.0
    %619 = vmatprep.subr.mxu0 0.0
    %620 = vmatpush1.msra.mxu0 0.0
    %621 = vmatprep.subr.mxu0 0.0
    %622 = vmatpush1.msra.mxu0 0.0
    %623 = vmatprep.subr.mxu0 0.0
    %624 = vmatpush1.msra.mxu0 0.0
    %625 = vmatprep.subr.mxu0 0.0
    %626 = vmatpush1.msra.mxu0 0.0
    %627 = vmatprep.subr.mxu0 0.0
    %628 = vmatpush1.msra.mxu0 0.0
    %629 = vmatprep.subr.mxu0 0.0
    %630 = vmatpush1.msra.mxu0 0.0
    %631 = vmatprep.subr.mxu0 0.0
    %632 = vmatpush1.msra.mxu0 0.0
    %633 = vmatprep.subr.mxu0 0.0
    %634 = vmatpush1.msra.mxu0 0.0
    %635 = vmatprep.subr.mxu0 0.0
    %636 = vmatpush1.msra.mxu0 0.0
    %637 = vmatprep.subr.mxu0 0.0
    %638 = vmatpush1.msra.mxu0 0.0
    %639 = vmatprep.subr.mxu0 0.0
    %640 = vmatpush1.msra.mxu0 0.0
    %641 = vmatprep.subr.mxu0 0.0
    %642 = vmatpush1.msra.mxu0 0.0
    %643 = vmatprep.subr.mxu0 0.0
    %644 = vmatpush1.msra.mxu0 0.0
    %645 = vmatprep.subr.mxu0 0.0
    %646 = vmatpush1.msra.mxu0 0.0
    %647 = vmatprep.subr.mxu0 0.0
    %648 = vmatpush1.msra.mxu0 0.0
    %649 = vmatprep.subr.mxu0 0.0
    %650 = vmatpush1.msra.mxu0 0.0
    %651 = vmatprep.subr.mxu0 0.0
    %652 = vmatpush1.msra.mxu0 0.0
    %653 = vmatprep.subr.mxu0 0.0
    %654 = vmatpush1.msra.mxu0 0.0
    %655 = vmatprep.subr.mxu0 0.0
    %656 = vmatpush1.msra.mxu0 0.0
    %657 = vmatprep.subr.mxu0 0.0
    %658 = vmatpush1.msra.mxu0 0.0
    %659 = vmatprep.subr.mxu0 0.0
    %660 = vmatpush1.msra.mxu0 0.0
    %661 = vmatprep.subr.mxu0 0.0
    %662 = vmatpush1.msra.mxu0 0.0
    %663 = vmatprep.subr.mxu0 0.0
    %664 = vmatpush1.msra.mxu0 0.0
    %665 = vmatprep.mubr.f32.mxu0 0.0
    %666 = vmatmul.mubr.f32.gmra.mrb[0].mxu0 %v590
    %v667 = vpop.f32.mrb[0].mxu0
    %v668 = vadd.f32 0.0, %v667
    %v669 = vpop.f32.mrb[0].mxu0
    %670 = vmatprep.mubr.f32.mxu0 0.0
    %671 = vmatmul.mubr.f32.gmra.mrb[0].mxu0 %v593
    %v672 = vpop.f32.mrb[0].mxu0
    %v673 = vadd.f32 0.0, %v672
    %v674 = vpop.f32.mrb[0].mxu0
    %675 = vmatprep.mubr.f32.mxu0 0.0
    %676 = vmatmul.mubr.f32.gmra.mrb[0].mxu0 %v596
    %v677 = vpop.f32.mrb[0].mxu0
    %v678 = vadd.f32 0.0, %v677
    %v679 = vpop.f32.mrb[0].mxu0
    %680 = vmatprep.mubr.f32.mxu0 0.0
    %681 = vmatmul.mubr.f32.gmra.mrb[0].mxu0 %v599
    %v682 = vpop.f32.mrb[0].mxu0
    %v683 = vadd.f32 0.0, %v682
    %v684 = vpop.f32.mrb[0].mxu0
    %685 = vdwg.mxu0
    %v686 = vmul.f32 %v568, %v153
    %v687 = vmul.f32 %v573, %v154
    %v688 = vmul.f32 %v578, %v155
    %v689 = vmul.f32 %v583, %v156
    %v690 = vmul.f32 %v668, %v153
    %v691 = vmul.f32 %v673, %v154
    %v692 = vmul.f32 %v678, %v155
    %v693 = vmul.f32 %v683, %v156
    %v694 = vsel %vm71, %v686, 0.0
    %v695 = vsel %vm71, %v687, 0.0
    %v696 = vadd.f32 %v694, %v695
    %v697 = vsel %vm71, %v688, 0.0
    %v698 = vadd.f32 %v696, %v697
    %v699 = vsel %vm71, %v689, 0.0
    %v700 = vadd.f32 %v698, %v699
    %v701 = vsel %vm71, %v690, 0.0
    %v702 = vsel %vm71, %v691, 0.0
    %v703 = vadd.f32 %v701, %v702
    %v704 = vsel %vm71, %v692, 0.0
    %v705 = vadd.f32 %v703, %v704
    %v706 = vsel %vm71, %v693, 0.0
    %v707 = vadd.f32 %v705, %v706
    %v708 = vld [vmem:[#allocation2] sm:$0xff]
    %v709 = vld [vmem:[#allocation2 + $0x8] sm:$0xff]
    %v710 = vld [vmem:[#allocation2 + $0x10] sm:$0xff]
    %v711 = vld [vmem:[#allocation2 + $0x18] sm:$0xff]
    %v712 = vld [vmem:[%s4] sm:$0x1]
    %v714 = vlaneseq
    %v715 = vshrl.u32 %v714, 7
    %v716 = vsub.s32 0, %v715
    %v717 = vrot.slane %v712, %v716
    %v720 = vsel %vm71, %v700, 0
    %v723 = vsel %vm71, %v707, 0
    %725 = vmatprep.subr.mxu0 0.0
    %726 = vmatpush1.msra.mxu0 %v708
    %727 = vmatprep.subr.mxu0 0.0
    %728 = vmatpush1.msra.mxu0 %v709
    %729 = vmatprep.subr.mxu0 0.0
    %730 = vmatpush1.msra.mxu0 %v710
    %731 = vmatprep.subr.mxu0 0.0
    %732 = vmatpush1.msra.mxu0 %v711
    %733 = vmatprep.subr.mxu0 0.0
    %734 = vmatpush1.msra.mxu0 0.0
    %735 = vmatprep.subr.mxu0 0.0
    %736 = vmatpush1.msra.mxu0 0.0
    %737 = vmatprep.subr.mxu0 0.0
    %738 = vmatpush1.msra.mxu0 0.0
    %739 = vmatprep.subr.mxu0 0.0
    %740 = vmatpush1.msra.mxu0 0.0
    %741 = vmatprep.subr.mxu0 0.0
    %742 = vmatpush1.msra.mxu0 0.0
    %743 = vmatprep.subr.mxu0 0.0
    %744 = vmatpush1.msra.mxu0 0.0
    %745 = vmatprep.subr.mxu0 0.0
    %746 = vmatpush1.msra.mxu0 0.0
    %747 = vmatprep.subr.mxu0 0.0
    %748 = vmatpush1.msra.mxu0 0.0
    %749 = vmatprep.subr.mxu0 0.0
    %750 = vmatpush1.msra.mxu0 0.0
    %751 = vmatprep.subr.mxu0 0.0
    %752 = vmatpush1.msra.mxu0 0.0
    %753 = vmatprep.subr.mxu0 0.0
    %754 = vmatpush1.msra.mxu0 0.0
    %755 = vmatprep.subr.mxu0 0.0
    %756 = vmatpush1.msra.mxu0 0.0
    %757 = vmatprep.subr.mxu0 0.0
    %758 = vmatpush1.msra.mxu0 0.0
    %759 = vmatprep.subr.mxu0 0.0
    %760 = vmatpush1.msra.mxu0 0.0
    %761 = vmatprep.subr.mxu0 0.0
    %762 = vmatpush1.msra.mxu0 0.0
    %763 = vmatprep.subr.mxu0 0.0
    %764 = vmatpush1.msra.mxu0 0.0
    %765 = vmatprep.subr.mxu0 0.0
    %766 = vmatpush1.msra.mxu0 0.0
    %767 = vmatprep.subr.mxu0 0.0
    %768 = vmatpush1.msra.mxu0 0.0
    %769 = vmatprep.subr.mxu0 0.0
    %770 = vmatpush1.msra.mxu0 0.0
    %771 = vmatprep.subr.mxu0 0.0
    %772 = vmatpush1.msra.mxu0 0.0
    %773 = vmatprep.subr.mxu0 0.0
    %774 = vmatpush1.msra.mxu0 0.0
    %775 = vmatprep.subr.mxu0 0.0
    %776 = vmatpush1.msra.mxu0 0.0
    %777 = vmatprep.subr.mxu0 0.0
    %778 = vmatpush1.msra.mxu0 0.0
    %779 = vmatprep.subr.mxu0 0.0
    %780 = vmatpush1.msra.mxu0 0.0
    %781 = vmatprep.subr.mxu0 0.0
    %782 = vmatpush1.msra.mxu0 0.0
    %783 = vmatprep.subr.mxu0 0.0
    %784 = vmatpush1.msra.mxu0 0.0
    %785 = vmatprep.subr.mxu0 0.0
    %786 = vmatpush1.msra.mxu0 0.0
    %787 = vmatprep.subr.mxu0 0.0
    %788 = vmatpush1.msra.mxu0 0.0
    %789 = vmatprep.mubr.f32.mxu0 0.0
    %790 = vmatmul.mubr.f32.gmra.mrb[0].mxu0 %v720
    %v791 = vpop.f32.mrb[0].mxu0
    %v792 = vadd.f32 %v717, %v791
    %v793 = vpop.f32.mrb[0].mxu0
    %794 = vmatprep.mubr.f32.mxu0 0.0
    %795 = vmatmul.mubr.f32.gmra.mrb[0].mxu0 %v723
    %v796 = vpop.f32.mrb[0].mxu0
    %v797 = vadd.f32 %v717, %v796
    %v798 = vpop.f32.mrb[0].mxu0
    %799 = vdwg.mxu0
    %800 = vst.msk [vmem:[#allocation7] sm:$0xff] %vm71, %v792
    %801 = vst.msk [vmem:[#allocation7 + $0x8] sm:$0xff] %vm71, %v797
    // Predicated region
    $region38: #{_forward.1} parent=1 // pred_check
      _
    $region39: #{_forward.1} parent=1 // pred_check_branch
      %803 = sbr.rel (0) target = $region41
    $region40: #{_forward.1} parent=1 // pred_region
      %s805 = ssub.s32 256, 256
      %806 = vsyncadd [#allocation4], %s805
      %s807 = sshll.u32 [#allocation7], 4
      %s808 = int_to_ptr.vmem [resolvable:$true] %s807
      %813 = dma.vmem_to_hbm [thread:$0]  %s808, 256, %s7, [#allocation4], 128, 128, 8
    $region41: #{_forward.1} parent=1 // pred_fallthru
      _
    // Predicated region
    $region42: #{_forward.1} parent=1 // pred_check
      _
    $region43: #{_forward.1} parent=1 // pred_check_branch
      %815 = sbr.rel (0) target = $region45
    $region44: #{_forward.1} parent=1 // pred_region
      %s817 = ssub.s32 1024, 1024
      %818 = vsyncadd [#allocation9], %s817
      %s819 = sshll.u32 [#allocation8], 4
      %s820 = int_to_ptr.vmem [resolvable:$true] %s819
      %825 = dma.vmem_to_hbm [thread:$0]  %s820, 1024, %s8, [#allocation9], 128, 128, 8
    $region45: #{_forward.1} parent=1 // pred_fallthru
      _
    // Predicated region
    $region46: #{_forward.1} parent=1 // pred_check
      _
    $region47: #{_forward.1} parent=1 // pred_check_branch
      %827 = sbr.rel (0) target = $region49
    $region48: #{_forward.1} parent=1 // pred_region
      %828 = dma.done [#allocation4], 256
    $region49: #{_forward.1} parent=1 // pred_fallthru
      _
    // Predicated region
    $region50: #{_forward.1} parent=1 // pred_check
      _
    $region51: #{_forward.1} parent=1 // pred_check_branch
      %830 = sbr.rel (0) target = $region53
    $region52: #{_forward.1} parent=1 // pred_region
      %831 = dma.done [#allocation9], 1024
    $region53: #{_forward.1} parent=1 // pred_fallthru
      _
    %832 = vsyncpa [#allocation3], 1
    %833 = vsyncpa [#allocation6], 1
    %834 = vsyncpa [#allocation4], 1
    %835 = vsyncpa [#allocation9], 1

</llo_original>
